<compile_context>
chip_gen: v7x
topology: tpu7x:2x2x1
jax: 0.10.0
libtpu: 0.0.40
codegen_flags: <defaults>
</compile_context>

<pallas_src>
import jax
import jax.numpy as jnp
from jax.experimental import pallas as pl
from jax.experimental.pallas import tpu as pltpu

NEG_SLOPE = 0.01  # PyTorch nn.LeakyReLU default negative_slope


def _round_up(x: int, m: int) -> int:
    return ((x + m - 1) // m) * m


def _cdiv(a: int, b: int) -> int:
    return -(-a // b)


def mlp_kernel(x_ref, w1_ref, b1_ref, w2_ref, b2_ref, o_ref):
    # Layer 1: Linear(in -> hidden) on the MXU (bf16 operands, f32 accumulate).
    h = jnp.dot(x_ref[...], w1_ref[...], preferred_element_type=jnp.float32)
    h = h + b1_ref[...]
    # LeakyReLU(0.01): single VALU max (slope in (0,1) => max(h, slope*h) == leaky_relu).
    h = jnp.maximum(h, jnp.float32(NEG_SLOPE) * h)
    # Layer 2: Linear(hidden -> out), no activation (last_activation=False).
    y = jnp.dot(h.astype(jnp.bfloat16), w2_ref[...],
                preferred_element_type=jnp.float32) + b2_ref[...]
    o_ref[...] = y.astype(o_ref.dtype)


def prepare_params(w1, b1, w2, b2):
    """One-time (per model, not per call) weight prep.

    Pads only the hidden dim to a multiple of 128 (lane-dense layout for the
    intermediate h and both MXU tiles; zero padding keeps the math exact) and
    casts weights to bf16 for the MXU. Biases stay f32.
    """
    in_dim, hid = w1.shape
    out_dim = w2.shape[1]
    hid_p = _round_up(hid, 128)

    w1_p = jnp.zeros((in_dim, hid_p), jnp.bfloat16).at[:, :hid].set(
        w1.astype(jnp.bfloat16))
    b1_p = jnp.zeros((1, hid_p), jnp.float32).at[:, :hid].set(
        b1.astype(jnp.float32).reshape(1, -1))
    w2_p = jnp.zeros((hid_p, out_dim), jnp.bfloat16).at[:hid, :].set(
        w2.astype(jnp.bfloat16))
    b2_p = b2.astype(jnp.float32).reshape(1, out_dim)

    return {"w1": w1_p, "b1": b1_p, "w2": w2_p, "b2": b2_p,
            "in_dim": in_dim, "hid": hid, "hid_p": hid_p, "out_dim": out_dim}


def _pick_batch_tile(B: int, avail_bytes: int, per_row_bytes: int, tb_max: int) -> int:
    """Largest multiple-of-8 batch tile that fits the budget, clamped to the
    real batch, with an even >=2-step grid when the batch allows (v7x parity)."""
    tb_fit = max(8, (avail_bytes // per_row_bytes) // 8 * 8)
    tb = max(8, min(tb_max, tb_fit, _round_up(B, 8)))
    if B > 8:
        steps = _cdiv(B, tb)
        if steps % 2 == 1:
            steps += 1
            tb = max(8, _round_up(_cdiv(B, steps), 8))
    return tb


def mlp_block_forward(x, params, *, tb_max=512,
                      vmem_budget_bytes=20 * 1024 * 1024,
                      out_dtype=jnp.float32):
    """x: [B, input_dim] float; params from prepare_params(). Returns [B, out_dim]."""
    B, in_dim = x.shape
    assert in_dim == params["in_dim"]
    hid_p = params["hid_p"]
    out_dim = params["out_dim"]
    w1_p, b1_p, w2_p, b2_p = params["w1"], params["b1"], params["w2"], params["b2"]
    out_size = jnp.dtype(out_dtype).itemsize

    # --- VMEM accounting (Pallas double-buffers every input BlockSpec, incl. the
    # resident weights, so count them twice).
    weight_bytes = 2 * ((w1_p.size + w2_p.size) * 2 + (b1_p.size + b2_p.size) * 4)
    per_row = in_dim * 2 * 2                        # bf16 x tile, double-buffered
    per_row += out_dim * out_size * 2               # out tile, double-buffered
    per_row += hid_p * 4 + hid_p * 2 + out_dim * 4  # f32 h, bf16 h copy, f32 y
    avail = max(vmem_budget_bytes - weight_bytes, per_row * 8)

    tb = _pick_batch_tile(B, avail, per_row, tb_max)
    B_p = _round_up(max(B, 1), tb)
    grid = (B_p // tb,)

    # Tell Mosaic what we actually need (default scoped limit is 16 MiB on v5e,
    # 32 MiB on v6e/v7x). Cap well under v7x's 64 MiB physical VMEM per TC.
    vmem_limit = weight_bytes + tb * per_row + (2 << 20)
    vmem_limit = int(min(max(vmem_limit, 24 << 20), 48 << 20))

    # bf16 x, batch padded only up to the (batch-clamped) tile.
    x_bf16 = x.astype(jnp.bfloat16)
    if B_p != B:
        x_bf16 = jnp.zeros((B_p, in_dim), jnp.bfloat16).at[:B].set(x_bf16)

    flops = 2 * B_p * (in_dim * hid_p + hid_p * out_dim)
    bytes_accessed = (B_p * in_dim * 2 + w1_p.size * 2 + w2_p.size * 2
                      + b1_p.size * 4 + b2_p.size * 4 + B_p * out_dim * out_size)

    y_p = pl.pallas_call(
        mlp_kernel,
        out_shape=jax.ShapeDtypeStruct((B_p, out_dim), out_dtype),
        grid_spec=pltpu.PrefetchScalarGridSpec(
            num_scalar_prefetch=0,
            grid=grid,
            in_specs=[
                pl.BlockSpec((tb, in_dim), lambda i: (i, 0)),      # x: batch-tiled, bf16
                pl.BlockSpec((in_dim, hid_p), lambda i: (0, 0)),   # W1: resident
                pl.BlockSpec((1, hid_p), lambda i: (0, 0)),        # b1: resident
                pl.BlockSpec((hid_p, out_dim), lambda i: (0, 0)),  # W2: resident
                pl.BlockSpec((1, out_dim), lambda i: (0, 0)),      # b2: resident
            ],
            out_specs=pl.BlockSpec((tb, out_dim), lambda i: (i, 0)),
        ),
        compiler_params=pltpu.CompilerParams(
            dimension_semantics=("parallel",),   # shard batch tiles across TCs on v7x
            vmem_limit_bytes=vmem_limit,
        ),
        cost_estimate=pl.CostEstimate(
            flops=flops, transcendentals=0, bytes_accessed=bytes_accessed),
    )(x_bf16, w1_p, b1_p, w2_p, b2_p)

    return y_p[:B]


def init_params(key, input_dim, hidden_dim, output_dim):
    """Deterministic init mimicking nn.Linear (uniform +/- 1/sqrt(fan_in))."""
    k1, k2, k3, k4 = jax.random.split(key, 4)
    lim1 = 1.0 / jnp.sqrt(jnp.float32(input_dim))
    lim2 = 1.0 / jnp.sqrt(jnp.float32(hidden_dim))
    # stored as [in, out] (transposed vs PyTorch's [out, in])
    w1 = jax.random.uniform(k1, (input_dim, hidden_dim), jnp.float32, -lim1, lim1)
    b1 = jax.random.uniform(k2, (hidden_dim,), jnp.float32, -lim1, lim1)
    w2 = jax.random.uniform(k3, (hidden_dim, output_dim), jnp.float32, -lim2, lim2)
    b2 = jax.random.uniform(k4, (output_dim,), jnp.float32, -lim2, lim2)
    return w1, b1, w2, b2


def reference_forward_bf16(x, w1, b1, w2, b2):
    """Same math as the kernel (bf16 MXU operands, f32 accumulation)."""
    h = jnp.dot(x.astype(jnp.bfloat16), w1.astype(jnp.bfloat16),
                preferred_element_type=jnp.float32) + b1
    h = jnp.maximum(h, NEG_SLOPE * h)
    return jnp.dot(h.astype(jnp.bfloat16), w2.astype(jnp.bfloat16),
                   preferred_element_type=jnp.float32) + b2


def reference_forward_f32(x, w1, b1, w2, b2):
    h = x @ w1 + b1
    h = jnp.where(h >= 0.0, h, NEG_SLOPE * h)
    return h @ w2 + b2


if __name__ == "__main__":
    # Small shapes consistent with MLPBlock(layers=2): x is [batch, input_dim]
    batch, input_dim, hidden_dim, output_dim = 16, 8, 32, 8

    key = jax.random.PRNGKey(0)
    kx, kp = jax.random.split(key)
    x = jax.random.normal(kx, (batch, input_dim), jnp.float32)
    w1, b1, w2, b2 = init_params(kp, input_dim, hidden_dim, output_dim)

    params = prepare_params(w1, b1, w2, b2)   # one-time weight pad/cast (hoisted)
    y = mlp_block_forward(x, params)
    y = jax.block_until_ready(y)
    assert y.shape == (batch, output_dim)

    # Tight check vs a reference using identical bf16-operand math.
    y_ref_bf16 = reference_forward_bf16(x, w1, b1, w2, b2)
    assert jnp.allclose(y, y_ref_bf16, atol=1e-2, rtol=1e-2), \
        "mismatch vs bf16-operand JAX reference"

    # Loose sanity check vs the pure-f32 reference (bf16 operands add ~1e-2 rel err).
    y_ref_f32 = reference_forward_f32(x, w1, b1, w2, b2)
    assert jnp.allclose(y, y_ref_f32, atol=5e-2, rtol=5e-2), \
        "mismatch vs f32 JAX reference"

    print("KERNEL_OK")
</pallas_src>

<mosaic_0001>
module attributes {stable_mosaic.version = 11 : i64} {
  func.func @mlp_kernel(%arg0: i32, %arg1: memref<8x8xbf16, #tpu.memory_space<vmem>>, %arg2: memref<8x128xbf16, #tpu.memory_space<vmem>>, %arg3: memref<1x128xf32, #tpu.memory_space<vmem>>, %arg4: memref<128x8xbf16, #tpu.memory_space<vmem>>, %arg5: memref<1x8xf32, #tpu.memory_space<vmem>>, %arg6: memref<8x8xf32, #tpu.memory_space<vmem>>) attributes {dimension_semantics = [#tpu.dimension_semantics<parallel>], iteration_bounds = array<i64: 2>, scalar_prefetch = 0 : i64, scratch_operands = 0 : i64, tpu.core_type = #tpu.core_type<tc>, window_params = [{transform_indices = @transform_0, window_bounds = array<i64: 8, 8>}, {pipeline_mode = #tpu.pipeline_mode<synchronous>, transform_indices = @transform_1, window_bounds = array<i64: 8, 128>}, {pipeline_mode = #tpu.pipeline_mode<synchronous>, transform_indices = @transform_2, window_bounds = array<i64: 1, 128>}, {pipeline_mode = #tpu.pipeline_mode<synchronous>, transform_indices = @transform_3, window_bounds = array<i64: 128, 8>}, {pipeline_mode = #tpu.pipeline_mode<synchronous>, transform_indices = @transform_4, window_bounds = array<i64: 1, 8>}, {transform_indices = @transform_5, window_bounds = array<i64: 8, 8>}]} {
    %c0 = arith.constant 0 : index
    %c0_0 = arith.constant 0 : index
    %0 = vector.load %arg1[%c0, %c0_0] : memref<8x8xbf16, #tpu.memory_space<vmem>>, vector<8x8xbf16>
    %c0_1 = arith.constant 0 : index
    %c0_2 = arith.constant 0 : index
    %1 = vector.load %arg2[%c0_1, %c0_2] : memref<8x128xbf16, #tpu.memory_space<vmem>>, vector<8x128xbf16>
    %cst = arith.constant dense<0.000000e+00> : vector<8x128xf32>
    %2 = tpu.matmul %0, %1, %cst {dimension_numbers = #tpu.dot_dimension_numbers<[1], [0], [0], [1], [0, 0, 1, 1], [], []>} : vector<8x8xbf16>, vector<8x128xbf16>, vector<8x128xf32> -> vector<8x128xf32>
    %c0_3 = arith.constant 0 : index
    %c0_4 = arith.constant 0 : index
    %3 = vector.load %arg3[%c0_3, %c0_4] : memref<1x128xf32, #tpu.memory_space<vmem>>, vector<1x128xf32>
    %4 = vector.broadcast %3 : vector<1x128xf32> to vector<8x128xf32>
    %5 = arith.addf %2, %4 : vector<8x128xf32>
    %cst_5 = arith.constant 0.00999999977 : f32
    %6 = vector.broadcast %cst_5 : f32 to vector<8x128xf32>
    %7 = arith.mulf %6, %5 : vector<8x128xf32>
    %8 = arith.maximumf %5, %7 : vector<8x128xf32>
    %9 = arith.truncf %8 : vector<8x128xf32> to vector<8x128xbf16>
    %c0_6 = arith.constant 0 : index
    %c0_7 = arith.constant 0 : index
    %10 = vector.load %arg4[%c0_6, %c0_7] : memref<128x8xbf16, #tpu.memory_space<vmem>>, vector<128x8xbf16>
    %cst_8 = arith.constant dense<0.000000e+00> : vector<8x8xf32>
    %11 = tpu.matmul %9, %10, %cst_8 {dimension_numbers = #tpu.dot_dimension_numbers<[1], [0], [0], [1], [0, 0, 1, 1], [], []>} : vector<8x128xbf16>, vector<128x8xbf16>, vector<8x8xf32> -> vector<8x8xf32>
    %c0_9 = arith.constant 0 : index
    %c0_10 = arith.constant 0 : index
    %12 = vector.load %arg5[%c0_9, %c0_10] : memref<1x8xf32, #tpu.memory_space<vmem>>, vector<1x8xf32>
    %13 = vector.broadcast %12 : vector<1x8xf32> to vector<8x8xf32>
    %14 = arith.addf %11, %13 : vector<8x8xf32>
    %c0_11 = arith.constant 0 : index
    %c0_12 = arith.constant 0 : index
    %15 = vector.load %arg6[%c0_11, %c0_12] : memref<8x8xf32, #tpu.memory_space<vmem>>, vector<8x8xf32>
    tpu.vector_store %arg6[%c0_11, %c0_12], %14 {strides = array<i32>} : memref<8x8xf32, #tpu.memory_space<vmem>>, vector<8x8xf32>,
    return
  }
  func.func @transform_0(%arg0: i32) -> (i32, i32) {
    %c0_i32 = arith.constant 0 : i32
    %c0_i32_0 = arith.constant 0 : i32
    return %arg0, %c0_i32 : i32, i32
  }
  func.func @transform_1(%arg0: i32) -> (i32, i32) {
    %c0_i32 = arith.constant 0 : i32
    %c0_i32_0 = arith.constant 0 : i32
    %c0_i32_1 = arith.constant 0 : i32
    return %c0_i32, %c0_i32_0 : i32, i32
  }
  func.func @transform_2(%arg0: i32) -> (i32, i32) {
    %c0_i32 = arith.constant 0 : i32
    %c0_i32_0 = arith.constant 0 : i32
    %c0_i32_1 = arith.constant 0 : i32
    return %c0_i32, %c0_i32_0 : i32, i32
  }
  func.func @transform_3(%arg0: i32) -> (i32, i32) {
    %c0_i32 = arith.constant 0 : i32
    %c0_i32_0 = arith.constant 0 : i32
    %c0_i32_1 = arith.constant 0 : i32
    return %c0_i32, %c0_i32_0 : i32, i32
  }
  func.func @transform_4(%arg0: i32) -> (i32, i32) {
    %c0_i32 = arith.constant 0 : i32
    %c0_i32_0 = arith.constant 0 : i32
    %c0_i32_1 = arith.constant 0 : i32
    return %c0_i32, %c0_i32_0 : i32, i32
  }
  func.func @transform_5(%arg0: i32) -> (i32, i32) {
    %c0_i32 = arith.constant 0 : i32
    %c0_i32_0 = arith.constant 0 : i32
    return %arg0, %c0_i32 : i32, i32
  }
}

</mosaic_0001>

<llo_original>
// kernel: tpu_custom_call.1
$region0: #{tpu_custom_call.1}
  #allocation0 [shape = 'u32[]', space=smem, size = 0x4, offset = 0x4, fixed_abs, tag = 'smem constant byte address 0x4 - core index']
  #allocation1 [shape = 'u32[144,128]{1,0:T(1,128)}', space=vmem, size = 0x12000, scoped, tag = 'internal scratch']
  %s0 = inlined_call_operand.vmem [shape: bf16[16,8], index: 0, kind: input, shape index: {}]
  %s1 = inlined_call_operand.vmem [shape: bf16[8,128], index: 1, kind: input, shape index: {}]
  %s2 = inlined_call_operand.vmem [shape: f32[1,128], index: 2, kind: input, shape index: {}]
  %s3 = inlined_call_operand.vmem [shape: bf16[128,8], index: 3, kind: input, shape index: {}]
  %s4 = inlined_call_operand.vmem [shape: f32[1,8], index: 4, kind: input, shape index: {}]
  %s5 = inlined_call_operand.vmem [shape: f32[16,8], index: 5, kind: output, shape index: {}]
  %s6 = sld [smem:[#allocation0]]
  $region53: #{tpu_custom_call.1} parent=0
    _
  %s8 = ssub.s32 1, %s6
  %s9 = scalar_select 0, %s8, %s6
  loop: start=0, step=1, limit=4
  $region2: #{tpu_custom_call.1} parent=0 // loop_pre_header
    _
  $region3: #{tpu_custom_call.1} parent=0 // loop_header
    %s11 = sphi 0, %s15
    %p12 = scmp.ge.s32.totalorder %s11, 4
    %s21 = sphi 0, %s23
    %s24 = sphi 0, %s21
    %s25 = sphi 0, %s24
    %s41 = sphi 0, %s25
    %s45 = sphi 0, %s45
    %s47 = sphi 0, %s45
    %s48 = sphi 0, %s47
    %s62 = sphi 0, %s48
    %s66 = sphi 0, %s66
    %s68 = sphi 0, %s66
    %s69 = sphi 0, %s68
    %s83 = sphi 0, %s69
    %s87 = sphi 0, %s87
    %s89 = sphi 0, %s87
    %s90 = sphi 0, %s89
    %s104 = sphi 0, %s90
    %s108 = sphi 0, %s108
    %s110 = sphi 0, %s108
    %s111 = sphi 0, %s110
    %s125 = sphi 0, %s111
    %s131 = sphi 0, %s133
    %s134 = sphi 0, %s131
    %s135 = sphi 0, %s134
    %s151 = sphi 0, %s135
  $region4: #{tpu_custom_call.1} parent=0 // loop_header_branch
    %14 = sbr.rel (%p12) target = $region8
  $region5: #{tpu_custom_call.1} parent=0 // loop_body
    %s16 = ssub.s32 %s11, 1
    %s17 = ssub.s32 %s11, 2
    %s18 = sadd.s32 %s11, 1
    %s19 = ssub.s32 %s11, %s18
    %p20 = scmp.eq.s32.totalorder %s19, 0
    %s22 = sadd.s32 %s21, 1
    %s23 = scalar_select %p20, %s21, %s22
    %p26 = pneg %p20
    %p27 = scmp.eq.s32.totalorder %s11, 1
    %p28 = por %p26, %p27
    %p29 = scmp.ne.s32.totalorder %s21, %s24
    %p30 = scmp.eq.s32.totalorder %s11, 0
    %p31 = por %p29, %p30
    %p32 = scmp.ne.s32.totalorder %s21, %s24
    %p33 = scmp.eq.s32.totalorder %s16, 1
    %p34 = por %p32, %p33
    %p35 = scmp.ne.s32.totalorder %s24, %s25
    %p36 = scmp.eq.s32.totalorder %s16, 0
    %p37 = por %p35, %p36
    %p38 = scmp.ne.s32.totalorder %s24, %s25
    %p39 = scmp.eq.s32.totalorder %s17, 1
    %p40 = por %p38, %p39
    %p42 = scmp.ne.s32.totalorder %s25, %s41
    %p43 = scmp.eq.s32.totalorder %s17, 0
    %p44 = por %p42, %p43
    %s46 = sadd.s32 %s45, 1
    %p49 = scmp.eq.s32.totalorder %s11, 1
    %p50 = scmp.ne.s32.totalorder %s45, %s47
    %p51 = scmp.eq.s32.totalorder %s11, 0
    %p52 = por %p50, %p51
    %p53 = scmp.ne.s32.totalorder %s45, %s47
    %p54 = scmp.eq.s32.totalorder %s16, 1
    %p55 = por %p53, %p54
    %p56 = scmp.ne.s32.totalorder %s47, %s48
    %p57 = scmp.eq.s32.totalorder %s16, 0
    %p58 = por %p56, %p57
    %p59 = scmp.ne.s32.totalorder %s47, %s48
    %p60 = scmp.eq.s32.totalorder %s17, 1
    %p61 = por %p59, %p60
    %p63 = scmp.ne.s32.totalorder %s48, %s62
    %p64 = scmp.eq.s32.totalorder %s17, 0
    %p65 = por %p63, %p64
    %s67 = sadd.s32 %s66, 1
    %p70 = scmp.eq.s32.totalorder %s11, 1
    %p71 = scmp.ne.s32.totalorder %s66, %s68
    %p72 = scmp.eq.s32.totalorder %s11, 0
    %p73 = por %p71, %p72
    %p74 = scmp.ne.s32.totalorder %s66, %s68
    %p75 = scmp.eq.s32.totalorder %s16, 1
    %p76 = por %p74, %p75
    %p77 = scmp.ne.s32.totalorder %s68, %s69
    %p78 = scmp.eq.s32.totalorder %s16, 0
    %p79 = por %p77, %p78
    %p80 = scmp.ne.s32.totalorder %s68, %s69
    %p81 = scmp.eq.s32.totalorder %s17, 1
    %p82 = por %p80, %p81
    %p84 = scmp.ne.s32.totalorder %s69, %s83
    %p85 = scmp.eq.s32.totalorder %s17, 0
    %p86 = por %p84, %p85
    %s88 = sadd.s32 %s87, 1
    %p91 = scmp.eq.s32.totalorder %s11, 1
    %p92 = scmp.ne.s32.totalorder %s87, %s89
    %p93 = scmp.eq.s32.totalorder %s11, 0
    %p94 = por %p92, %p93
    %p95 = scmp.ne.s32.totalorder %s87, %s89
    %p96 = scmp.eq.s32.totalorder %s16, 1
    %p97 = por %p95, %p96
    %p98 = scmp.ne.s32.totalorder %s89, %s90
    %p99 = scmp.eq.s32.totalorder %s16, 0
    %p100 = por %p98, %p99
    %p101 = scmp.ne.s32.totalorder %s89, %s90
    %p102 = scmp.eq.s32.totalorder %s17, 1
    %p103 = por %p101, %p102
    %p105 = scmp.ne.s32.totalorder %s90, %s104
    %p106 = scmp.eq.s32.totalorder %s17, 0
    %p107 = por %p105, %p106
    %s109 = sadd.s32 %s108, 1
    %p112 = scmp.eq.s32.totalorder %s11, 1
    %p113 = scmp.ne.s32.totalorder %s108, %s110
    %p114 = scmp.eq.s32.totalorder %s11, 0
    %p115 = por %p113, %p114
    %p116 = scmp.ne.s32.totalorder %s108, %s110
    %p117 = scmp.eq.s32.totalorder %s16, 1
    %p118 = por %p116, %p117
    %p119 = scmp.ne.s32.totalorder %s110, %s111
    %p120 = scmp.eq.s32.totalorder %s16, 0
    %p121 = por %p119, %p120
    %p122 = scmp.ne.s32.totalorder %s110, %s111
    %p123 = scmp.eq.s32.totalorder %s17, 1
    %p124 = por %p122, %p123
    %p126 = scmp.ne.s32.totalorder %s111, %s125
    %p127 = scmp.eq.s32.totalorder %s17, 0
    %p128 = por %p126, %p127
    %s129 = ssub.s32 %s11, %s18
    %p130 = scmp.eq.s32.totalorder %s129, 0
    %s132 = sadd.s32 %s131, 1
    %s133 = scalar_select %p130, %s131, %s132
    %p136 = pneg %p130
    %p137 = scmp.eq.s32.totalorder %s11, 1
    %p138 = por %p136, %p137
    %p139 = scmp.ne.s32.totalorder %s131, %s134
    %p140 = scmp.eq.s32.totalorder %s11, 0
    %p141 = por %p139, %p140
    %p142 = scmp.ne.s32.totalorder %s131, %s134
    %p143 = scmp.eq.s32.totalorder %s16, 1
    %p144 = por %p142, %p143
    %p145 = scmp.ne.s32.totalorder %s134, %s135
    %p146 = scmp.eq.s32.totalorder %s16, 0
    %p147 = por %p145, %p146
    %p148 = scmp.ne.s32.totalorder %s134, %s135
    %p149 = scmp.eq.s32.totalorder %s17, 1
    %p150 = por %p148, %p149
    %p152 = scmp.ne.s32.totalorder %s135, %s151
    %p153 = scmp.eq.s32.totalorder %s17, 0
    %p154 = por %p152, %p153
    %p155 = scmp.le.s32.totalorder 1, %s11
    %p156 = scmp.lt.s32.totalorder %s11, 3
    %p157 = pnand %p155, %p156
    %p158 = pneg %p157
    // Predicated region
    $region9: #{tpu_custom_call.1} parent=5 // pred_check
      _
    $region10: #{tpu_custom_call.1} parent=5 // pred_check_branch
      %160 = sbr.rel (%p157) target = $region12
    $region11: #{tpu_custom_call.1} parent=5 // pred_region
      %s161 = ssub.s32 %s11, 1
      // Predicated region
      $region13: #{tpu_custom_call.1} parent=11 // pred_check
        %p162 = pneg %p58
      $region14: #{tpu_custom_call.1} parent=11 // pred_check_branch
        %164 = sbr.rel (%p162) target = $region16
      $region15: #{tpu_custom_call.1} parent=11 // pred_region
        _
      $region16: #{tpu_custom_call.1} parent=11 // pred_fallthru
        _
      // Predicated region
      $region17: #{tpu_custom_call.1} parent=11 // pred_check
        %p165 = pneg %p79
      $region18: #{tpu_custom_call.1} parent=11 // pred_check_branch
        %167 = sbr.rel (%p165) target = $region20
      $region19: #{tpu_custom_call.1} parent=11 // pred_region
        _
      $region20: #{tpu_custom_call.1} parent=11 // pred_fallthru
        _
      // Predicated region
      $region21: #{tpu_custom_call.1} parent=11 // pred_check
        %p168 = pneg %p100
      $region22: #{tpu_custom_call.1} parent=11 // pred_check_branch
        %170 = sbr.rel (%p168) target = $region24
      $region23: #{tpu_custom_call.1} parent=11 // pred_region
        _
      $region24: #{tpu_custom_call.1} parent=11 // pred_fallthru
        _
      // Predicated region
      $region25: #{tpu_custom_call.1} parent=11 // pred_check
        %p171 = pneg %p121
      $region26: #{tpu_custom_call.1} parent=11 // pred_check_branch
        %173 = sbr.rel (%p171) target = $region28
      $region27: #{tpu_custom_call.1} parent=11 // pred_region
        _
      $region28: #{tpu_custom_call.1} parent=11 // pred_fallthru
        _
    $region12: #{tpu_custom_call.1} parent=5 // pred_fallthru
      _
    %p174 = scmp.lt.s32.totalorder %s11, 2
    // Predicated region
    $region29: #{tpu_custom_call.1} parent=5 // pred_check
      %p175 = pneg %p174
    $region30: #{tpu_custom_call.1} parent=5 // pred_check_branch
      %177 = sbr.rel (%p175) target = $region32
    $region31: #{tpu_custom_call.1} parent=5 // pred_region
      // Predicated region
      $region33: #{tpu_custom_call.1} parent=31 // pred_check
        %p178 = pneg %p31
      $region34: #{tpu_custom_call.1} parent=31 // pred_check_branch
        %180 = sbr.rel (%p178) target = $region36
      $region35: #{tpu_custom_call.1} parent=31 // pred_region
        %p181 = scmp.lt.s32.totalorder %s11, 1
        %s182 = scalar_select %p181, %s11, 1
        %s183 = smul.addr %s182, 4
        %s184 = scalar_lea.vmem %s0, %s183
      $region36: #{tpu_custom_call.1} parent=31 // pred_fallthru
        _
    $region32: #{tpu_custom_call.1} parent=5 // pred_fallthru
      _
    %p185 = scmp.le.s32.totalorder 1, %s11
    %p186 = scmp.lt.s32.totalorder %s11, 3
    %p187 = pnand %p185, %p186
    %p188 = pneg %p187
    // Predicated region
    $region37: #{tpu_custom_call.1} parent=5 // pred_check
      _
    $region38: #{tpu_custom_call.1} parent=5 // pred_check_branch
      %190 = sbr.rel (%p187) target = $region40
    $region39: #{tpu_custom_call.1} parent=5 // pred_region
      %s191 = ssub.s32 %s11, 1
      %p192 = scmp.lt.s32.totalorder %s16, 1
      %s193 = scalar_select %p192, %s16, 1
      %s194 = smul.addr %s193, 4
      %s195 = scalar_lea.vmem %s0, %s194
      %p196 = pneg %p37
      %p197 = pneg %p34
      %p198 = pneg %p58
      %p199 = pneg %p55
      %p200 = pneg %p79
      %p201 = pneg %p76
      %p202 = pneg %p100
      %p203 = pneg %p97
      %p204 = pneg %p121
      %p205 = pneg %p118
      %p206 = pneg %p147
      %p207 = pneg %p144
      %p208 = scmp.lt.s32.totalorder %s16, 1
      %s209 = scalar_select %p208, %s16, 1
      %s210 = smul.addr %s209, 8
      %s211 = scalar_lea.vmem %s5, %s210
      %p212 = scmp.lt.s32.totalorder %s16, 1
      %s213 = scalar_select %p212, %s16, 1
      %s214 = smul.addr %s213, 4
      %s215 = scalar_lea.vmem %s0, %s214
      %p216 = scmp.lt.s32.totalorder %s16, 1
      %s217 = scalar_select %p216, %s16, 1
      %s218 = smul.addr %s217, 8
      %s219 = scalar_lea.vmem %s5, %s218
      %v221 = vld [vmem:[%s215] sm:$0xf]
      %v222 = vld [vmem:[%s1] sm:$0xf]
      %v223 = vld [vmem:[%s2] sm:$0x1]
      %v225 = vlaneseq
      %v226 = vshrl.u32 %v225, 7
      %v227 = vsub.s32 0, %v226
      %v228 = vrot.slane %v223, %v227
      %vm230 = vcmask 64512
      %v232 = vsel %vm230, %v221, 0
      %vm234 = vcmask 1043456
      %v236 = vsel %vm234, %v222, 0
      %238 = vmatprep.subr.bf16.mxu0 0
      %239 = vmatpush1.bf16.msra.mxu0 %v236
      %240 = vmatprep.subr.bf16.mxu0 0
      %241 = vmatpush1.bf16.msra.mxu0 0
      %242 = vmatprep.subr.bf16.mxu0 0
      %243 = vmatpush1.bf16.msra.mxu0 0
      %244 = vmatprep.subr.bf16.mxu0 0
      %245 = vmatpush1.bf16.msra.mxu0 0
      %246 = vmatprep.subr.bf16.mxu0 0
      %247 = vmatpush1.bf16.msra.mxu0 0
      %248 = vmatprep.subr.bf16.mxu0 0
      %249 = vmatpush1.bf16.msra.mxu0 0
      %250 = vmatprep.subr.bf16.mxu0 0
      %251 = vmatpush1.bf16.msra.mxu0 0
      %252 = vmatprep.subr.bf16.mxu0 0
      %253 = vmatpush1.bf16.msra.mxu0 0
      %254 = vmatprep.subr.bf16.mxu0 0
      %255 = vmatpush1.bf16.msra.mxu0 0
      %256 = vmatprep.subr.bf16.mxu0 0
      %257 = vmatpush1.bf16.msra.mxu0 0
      %258 = vmatprep.subr.bf16.mxu0 0
      %259 = vmatpush1.bf16.msra.mxu0 0
      %260 = vmatprep.subr.bf16.mxu0 0
      %261 = vmatpush1.bf16.msra.mxu0 0
      %262 = vmatprep.subr.bf16.mxu0 0
      %263 = vmatpush1.bf16.msra.mxu0 0
      %264 = vmatprep.subr.bf16.mxu0 0
      %265 = vmatpush1.bf16.msra.mxu0 0
      %266 = vmatprep.subr.bf16.mxu0 0
      %267 = vmatpush1.bf16.msra.mxu0 0
      %268 = vmatprep.subr.bf16.mxu0 0
      %269 = vmatpush1.bf16.msra.mxu0 0
      %270 = vmatprep.mubr.bf16.mxu0 0
      %271 = vmatmul.mubr.bf16.gmra.mrb[0].mxu0 %v232
      %v272 = vpop.f32.mrb[0].mxu0
      %v273 = vadd.f32 %v228, %v272
      %v274 = vpop.f32.mrb[0].mxu0
      %v275 = vpop.f32.mrb[0].mxu0
      %v276 = vpop.f32.mrb[0].mxu0
      %277 = vdwg.mxu0
      %v278 = vmul.f32 %v273, 0.01
      %v279 = vmax.f32 %v273, %v278
      %v280 = vpack.c.bf16 %v279, %v279
      %v281 = vld [vmem:[%s3] sm:$0xf]
      %v282 = vld [vmem:[%s3 + $0x4] sm:$0xf]
      %v283 = vld [vmem:[%s3 + $0x8] sm:$0xf]
      %v284 = vld [vmem:[%s3 + $0xc] sm:$0xf]
      %v285 = vld [vmem:[%s3 + $0x10] sm:$0xf]
      %v286 = vld [vmem:[%s3 + $0x14] sm:$0xf]
      %v287 = vld [vmem:[%s3 + $0x18] sm:$0xf]
      %v288 = vld [vmem:[%s3 + $0x1c] sm:$0xf]
      %v289 = vld [vmem:[%s3 + $0x20] sm:$0xf]
      %v290 = vld [vmem:[%s3 + $0x24] sm:$0xf]
      %v291 = vld [vmem:[%s3 + $0x28] sm:$0xf]
      %v292 = vld [vmem:[%s3 + $0x2c] sm:$0xf]
      %v293 = vld [vmem:[%s3 + $0x30] sm:$0xf]
      %v294 = vld [vmem:[%s3 + $0x34] sm:$0xf]
      %v295 = vld [vmem:[%s3 + $0x38] sm:$0xf]
      %v296 = vld [vmem:[%s3 + $0x3c] sm:$0xf]
      %v297 = vld [vmem:[%s4] sm:$0x1]
      %v299 = vlaneseq
      %v300 = vshrl.u32 %v299, 7
      %v301 = vsub.s32 0, %v300
      %v302 = vrot.slane %v297, %v301
      %v320 = vunpack.c.l.b16 %v281
      %v321 = vunpack.c.l.b16 %v282
      %v322 = vunpack.c.l.b16 %v283
      %v323 = vunpack.c.l.b16 %v284
      %v324 = vunpack.c.l.b16 %v285
      %v325 = vunpack.c.l.b16 %v286
      %v326 = vunpack.c.l.b16 %v287
      %v327 = vunpack.c.l.b16 %v288
      %v328 = vunpack.c.l.b16 %v289
      %v329 = vunpack.c.l.b16 %v290
      %v330 = vunpack.c.l.b16 %v291
      %v331 = vunpack.c.l.b16 %v292
      %v332 = vunpack.c.l.b16 %v293
      %v333 = vunpack.c.l.b16 %v294
      %v334 = vunpack.c.l.b16 %v295
      %v335 = vunpack.c.l.b16 %v296
      %v336 = vpack.c.b16 %v321, %v320
      %v337 = vpack.c.b16 %v323, %v322
      %v338 = vpack.c.b16 %v325, %v324
      %v339 = vpack.c.b16 %v327, %v326
      %v340 = vpack.c.b16 %v329, %v328
      %v341 = vpack.c.b16 %v331, %v330
      %v342 = vpack.c.b16 %v333, %v332
      %v343 = vpack.c.b16 %v335, %v334
      %352 = vmatprep.subr.bf16.mxu0 0
      %353 = vmatpush1.bf16.msra.mxu0 %v336
      %354 = vmatprep.subr.bf16.mxu0 0
      %355 = vmatpush1.bf16.msra.mxu0 %v337
      %356 = vmatprep.subr.bf16.mxu0 0
      %357 = vmatpush1.bf16.msra.mxu0 %v338
      %358 = vmatprep.subr.bf16.mxu0 0
      %359 = vmatpush1.bf16.msra.mxu0 %v339
      %360 = vmatprep.subr.bf16.mxu0 0
      %361 = vmatpush1.bf16.msra.mxu0 %v340
      %362 = vmatprep.subr.bf16.mxu0 0
      %363 = vmatpush1.bf16.msra.mxu0 %v341
      %364 = vmatprep.subr.bf16.mxu0 0
      %365 = vmatpush1.bf16.msra.mxu0 %v342
      %366 = vmatprep.subr.bf16.mxu0 0
      %367 = vmatpush1.bf16.msra.mxu0 %v343
      %368 = vmatprep.subr.bf16.mxu0 0
      %369 = vmatpush1.bf16.msra.mxu0 0
      %370 = vmatprep.subr.bf16.mxu0 0
      %371 = vmatpush1.bf16.msra.mxu0 0
      %372 = vmatprep.subr.bf16.mxu0 0
      %373 = vmatpush1.bf16.msra.mxu0 0
      %374 = vmatprep.subr.bf16.mxu0 0
      %375 = vmatpush1.bf16.msra.mxu0 0
      %376 = vmatprep.subr.bf16.mxu0 0
      %377 = vmatpush1.bf16.msra.mxu0 0
      %378 = vmatprep.subr.bf16.mxu0 0
      %379 = vmatpush1.bf16.msra.mxu0 0
      %380 = vmatprep.subr.bf16.mxu0 0
      %381 = vmatpush1.bf16.msra.mxu0 0
      %382 = vmatprep.subr.bf16.mxu0 0
      %383 = vmatpush1.bf16.msra.mxu0 0
      %384 = vmatprep.mubr.bf16.mxu0 0
      %385 = vmatmul.mubr.bf16.gmra.mrb[0].mxu0 %v280
      %v386 = vpop.f32.mrb[0].mxu0
      %v387 = vadd.f32 %v302, %v386
      %v388 = vpop.f32.mrb[0].mxu0
      %v389 = vpop.f32.mrb[0].mxu0
      %v390 = vpop.f32.mrb[0].mxu0
      %391 = vdwg.mxu0
      %392 = vst.msk [vmem:[%s219] sm:$0xff] %vm230, %v387
      %p393 = scmp.lt.s32.totalorder %s16, 1
      %s394 = scalar_select %p393, %s16, 1
      %s395 = smul.addr %s394, 8
      %s396 = scalar_lea.vmem %s5, %s395
      // Predicated region
      $region41: #{tpu_custom_call.1} parent=39 // pred_check
        %p397 = pneg %p144
      $region42: #{tpu_custom_call.1} parent=39 // pred_check_branch
        %399 = sbr.rel (%p397) target = $region44
      $region43: #{tpu_custom_call.1} parent=39 // pred_region
        _
      $region44: #{tpu_custom_call.1} parent=39 // pred_fallthru
        _
    $region40: #{tpu_custom_call.1} parent=5 // pred_fallthru
      _
    %p400 = scmp.le.s32.totalorder 2, %s11
    // Predicated region
    $region45: #{tpu_custom_call.1} parent=5 // pred_check
      %p401 = pneg %p400
    $region46: #{tpu_custom_call.1} parent=5 // pred_check_branch
      %403 = sbr.rel (%p401) target = $region48
    $region47: #{tpu_custom_call.1} parent=5 // pred_region
      %s404 = ssub.s32 %s11, 2
      // Predicated region
      $region49: #{tpu_custom_call.1} parent=47 // pred_check
        %p405 = pneg %p150
      $region50: #{tpu_custom_call.1} parent=47 // pred_check_branch
        %407 = sbr.rel (%p405) target = $region52
      $region51: #{tpu_custom_call.1} parent=47 // pred_region
        %p408 = scmp.lt.s32.totalorder %s17, 1
        %s409 = scalar_select %p408, %s17, 1
        %s410 = smul.addr %s409, 8
        %s411 = scalar_lea.vmem %s5, %s410
      $region52: #{tpu_custom_call.1} parent=47 // pred_fallthru
        _
    $region48: #{tpu_custom_call.1} parent=5 // pred_fallthru
      _
  $region6: #{tpu_custom_call.1} parent=0 // loop_footer
    %s15 = sadd.s32 1, %s11
  $region7: #{tpu_custom_call.1} parent=0 // loop_footer_branch
    %10 = sbr.rel target = $region3
  $region8: #{tpu_custom_call.1} parent=0 // loop_exit
    _

</llo_original>
